<compile_context>
chip_gen: v6e
topology: v6e:2x2x1
jax: 0.10.0
libtpu: 0.0.40
codegen_flags: <defaults>
</compile_context>

<pallas_src>
import functools

import jax
import jax.numpy as jnp
from jax.experimental import pallas as pl
from jax.experimental.pallas import tpu as pltpu


def _attn_scalar_kernel(w_ref, qkv_ref, o_ref):
    # w_ref   (SMEM, shape (8,)): [wq, bq, wk, bk, wv, bv, wo, bo]
    # qkv_ref (SMEM, shape (3,)): [q, k, v]
    wv = w_ref[4]
    bv = w_ref[5]
    wo = w_ref[6]
    bo = w_ref[7]
    v = qkv_ref[2]

    # For in_len == 1: softmax over the single scaled q.k logit == 1.0 exactly
    # (scale-invariant), dropout(p=0.0) == identity, so
    #   attention_output == value_weight(value).
    # query/key projections are mathematically dead and intentionally omitted.
    vt = v * wv + bv                 # value_weight Linear(1,1)
    o_ref[0] = vt * wo + bo          # out_weight Linear(1,1)


def pack_params(params):
    """Precompute the static Linear(1,1) parameter vector once (init time)."""
    return jnp.array(
        [params["wq"], params["bq"],
         params["wk"], params["bk"],
         params["wv"], params["bv"],
         params["wo"], params["bo"]], dtype=jnp.float32)


@functools.partial(jax.jit, static_argnames=("p",))
def model_forward(param_vec, query, key, value, input_tensor, input2_tensor,
                  p=0.0):
    """Mirrors Model.forward. `input2_tensor` is shape-only / unused in torch."""
    del input2_tensor
    # Dropout-identity shortcut is only exact in eval mode.
    assert p == 0.0, "only p == 0.0 (eval-mode dropout) is supported"

    in_len = int(input_tensor.shape[2])
    # Constraints the PyTorch forward itself imposes (otherwise it raises):
    assert in_len == 1, (
        "the .view(in_len,1,1) on 1-element q/k/v, the second matmul and the "
        "final Linear(1,1) require in_len == 1")
    assert query.size == in_len and key.size == in_len and value.size == in_len

    # Per-call packing is just the 3 q/k/v scalars; params are pre-packed.
    qkv = jnp.concatenate([
        query.reshape(-1), key.reshape(-1), value.reshape(-1)
    ]).astype(jnp.float32)

    out = pl.pallas_call(
        _attn_scalar_kernel,
        out_shape=jax.ShapeDtypeStruct((1,), jnp.float32),
        in_specs=[pl.BlockSpec(memory_space=pltpu.MemorySpace.SMEM),
                  pl.BlockSpec(memory_space=pltpu.MemorySpace.SMEM)],
        out_specs=pl.BlockSpec(memory_space=pltpu.MemorySpace.SMEM),
    )(param_vec, qkv)

    # Matches torch: output.view(1, 1, -1) -> out_weight -> (1, 1, 1).
    return out.reshape(1, 1, in_len)


if __name__ == "__main__":
    rng = jax.random.PRNGKey(0)
    keys = jax.random.split(rng, 13)

    # Deterministic Linear(1,1) parameters (weight (1,1), bias (1,)) as scalars.
    params = {
        "wq": jax.random.normal(keys[0], ()), "bq": jax.random.normal(keys[1], ()),
        "wk": jax.random.normal(keys[2], ()), "bk": jax.random.normal(keys[3], ()),
        "wv": jax.random.normal(keys[4], ()), "bv": jax.random.normal(keys[5], ()),
        "wo": jax.random.normal(keys[6], ()), "bo": jax.random.normal(keys[7], ()),
    }
    param_vec = pack_params(params)   # packed once, reused every forward call

    # Small shapes consistent with a well-defined forward:
    # in_len = input_tensor.shape[2] must be 1 and equal q/k/v's element count.
    query = jax.random.normal(keys[8], (1, 1, 1), dtype=jnp.float32)
    key = jax.random.normal(keys[9], (1, 1, 1), dtype=jnp.float32)
    value = jax.random.normal(keys[10], (1, 1, 1), dtype=jnp.float32)
    input_tensor = jax.random.normal(keys[11], (1, 1, 1, 64), dtype=jnp.float32)
    input2_tensor = jax.random.normal(keys[12], (1, 1, 1, 64), dtype=jnp.float32)

    w = model_forward(param_vec, query, key, value, input_tensor, input2_tensor)
    w = jax.block_until_ready(w)

    # Pure-JAX reference of the same compute graph (for in_len == 1 the
    # softmax is identically 1, so w == wo * (wv * value + bv) + bo).
    ref = (params["wo"] * (params["wv"] * value.reshape(()) + params["bv"])
           + params["bo"]).astype(jnp.float32).reshape(1, 1, 1)
    assert w.shape == (1, 1, 1)
    assert jnp.allclose(w, ref, atol=1e-5, rtol=1e-5), (w, ref)

    print("KERNEL_OK")
</pallas_src>

<mosaic_0001>
module attributes {stable_mosaic.version = 11 : i64} {
  func.func @_attn_scalar_kernel(%arg0: memref<8xf32, #tpu.memory_space<smem>>, %arg1: memref<3xf32, #tpu.memory_space<smem>>, %arg2: memref<1xf32, #tpu.memory_space<smem>>) attributes {dimension_semantics = [], scalar_prefetch = 0 : i64, scratch_operands = 0 : i64, tpu.core_type = #tpu.core_type<tc>} {
    %c4 = arith.constant 4 : index
    %0 = memref.load %arg0[%c4] : memref<8xf32, #tpu.memory_space<smem>>
    %c5 = arith.constant 5 : index
    %1 = memref.load %arg0[%c5] : memref<8xf32, #tpu.memory_space<smem>>
    %c6 = arith.constant 6 : index
    %2 = memref.load %arg0[%c6] : memref<8xf32, #tpu.memory_space<smem>>
    %c7 = arith.constant 7 : index
    %3 = memref.load %arg0[%c7] : memref<8xf32, #tpu.memory_space<smem>>
    %c2 = arith.constant 2 : index
    %4 = memref.load %arg1[%c2] : memref<3xf32, #tpu.memory_space<smem>>
    %5 = arith.mulf %4, %0 : f32
    %6 = arith.addf %5, %1 : f32
    %7 = arith.mulf %6, %2 : f32
    %8 = arith.addf %7, %3 : f32
    %c0 = arith.constant 0 : index
    %9 = memref.load %arg2[%c0] : memref<1xf32, #tpu.memory_space<smem>>
    memref.store %8, %arg2[%c0] : memref<1xf32, #tpu.memory_space<smem>>
    return
  }
}

</mosaic_0001>

<llo_original>
// kernel: model_forward.1
$region0: #{model_forward.1}
  #allocation0 [shape = 'u32[]', space=smem, size = 0x4, offset = 0x4, fixed_abs, tag = 'smem constant byte address 0x4 - core index']
  #allocation1 [shape = 'u32[144,128]{1,0:T(1,128)}', space=vmem, size = 0x12000, scoped, tag = 'internal scratch']
  %s0 = inlined_call_operand.vmem [shape: f32[8], index: 0, kind: input, shape index: {}]
  %s1 = inlined_call_operand.vmem [shape: f32[3], index: 1, kind: input, shape index: {}]
  %s2 = inlined_call_operand.hbm [shape: f32[1], index: 2, kind: output, shape index: {}]
  %s3 = sld [smem:[#allocation0]]
  $region26: #{model_forward.1} parent=0
    _
  %s5 = ssub.s32 1, %s3
  %s6 = scalar_select 0, %s5, %s3
  $region1: #{model_forward.1} parent=0
    #allocation2 [shape = 'u8[512]{0}', space=smem, size = 0x200, scoped, tag = 'input window, operand 0, single buffered']
    #allocation3 [shape = 's32[1]{0}', space=sflag, size = 0x4, scoped, tag = 'scoped memory for model_forward.1']
    #allocation4 [shape = 's32[1]{0}', space=sflag, size = 0x4, scoped, tag = 'scoped memory for model_forward.1']
    #allocation5 [shape = 'u8[512]{0}', space=smem, size = 0x200, scoped, tag = 'input window, operand 1, single buffered']
    #allocation6 [shape = 's32[1]{0}', space=sflag, size = 0x4, scoped, tag = 'scoped memory for model_forward.1']
    #allocation7 [shape = 'u8[512]{0}', space=smem, size = 0x200, scoped, tag = 'output window, operand 0, single buffered']
    %7 = vsyncpa [#allocation4], 0
    %8 = vsyncpa [#allocation6], 0
    %9 = vsyncpa [#allocation3], 0
    // Predicated region
    $region2: #{model_forward.1} parent=1 // pred_check
      _
    $region3: #{model_forward.1} parent=1 // pred_check_branch
      %11 = sbr.rel (0) target = $region5
    $region4: #{model_forward.1} parent=1 // pred_region
      %s13 = ssub.s32 16, 16
      %14 = vsyncadd [#allocation4], %s13
      %s16 = sshll.u32 %s0, 4
      %s17 = int_to_ptr.vmem [resolvable:$true] %s16
      %19 = dma.vmem_to_smem %s17, 16, [#allocation2], [#allocation4]
    $region5: #{model_forward.1} parent=1 // pred_fallthru
      _
    // Predicated region
    $region6: #{model_forward.1} parent=1 // pred_check
      _
    $region7: #{model_forward.1} parent=1 // pred_check_branch
      %21 = sbr.rel (0) target = $region9
    $region8: #{model_forward.1} parent=1 // pred_region
      %s23 = ssub.s32 16, 16
      %24 = vsyncadd [#allocation6], %s23
      %s26 = sshll.u32 %s1, 4
      %s27 = int_to_ptr.vmem [resolvable:$true] %s26
      %29 = dma.vmem_to_smem %s27, 16, [#allocation5], [#allocation6]
    $region9: #{model_forward.1} parent=1 // pred_fallthru
      _
    // Predicated region
    $region10: #{model_forward.1} parent=1 // pred_check
      _
    $region11: #{model_forward.1} parent=1 // pred_check_branch
      %31 = sbr.rel (0) target = $region13
    $region12: #{model_forward.1} parent=1 // pred_region
      %32 = dma.done [#allocation4], 16
    $region13: #{model_forward.1} parent=1 // pred_fallthru
      _
    // Predicated region
    $region14: #{model_forward.1} parent=1 // pred_check
      _
    $region15: #{model_forward.1} parent=1 // pred_check_branch
      %34 = sbr.rel (0) target = $region17
    $region16: #{model_forward.1} parent=1 // pred_region
      %35 = dma.done [#allocation6], 16
    $region17: #{model_forward.1} parent=1 // pred_fallthru
      _
    %36 = sfence
    %s37 = sld [smem:[#allocation2 + $0x4]]
    %s38 = sld [smem:[#allocation2 + $0x5]]
    %s39 = sld [smem:[#allocation2 + $0x6]]
    %s40 = sld [smem:[#allocation2 + $0x7]]
    %s41 = sld [smem:[#allocation5 + $0x2]]
    %s42 = smul.f32 %s41, %s37
    %s43 = sadd.f32 %s42, %s38
    %s44 = smul.f32 %s43, %s39
    %s45 = sadd.f32 %s44, %s40
    %s46 = scalar_lea.smem [#allocation7], 0
    %47 = sst [smem:[%s46]] %s45
    // Predicated region
    $region18: #{model_forward.1} parent=1 // pred_check
      _
    $region19: #{model_forward.1} parent=1 // pred_check_branch
      %49 = sbr.rel (0) target = $region21
    $region20: #{model_forward.1} parent=1 // pred_region
      %s51 = ssub.s32 16, 16
      %52 = vsyncadd [#allocation3], %s51
      %55 = dma.smem_to_hbm [#allocation7], 16, %s2, [#allocation3]
    $region21: #{model_forward.1} parent=1 // pred_fallthru
      _
    // Predicated region
    $region22: #{model_forward.1} parent=1 // pred_check
      _
    $region23: #{model_forward.1} parent=1 // pred_check_branch
      %57 = sbr.rel (0) target = $region25
    $region24: #{model_forward.1} parent=1 // pred_region
      %58 = dma.done [#allocation3], 16
    $region25: #{model_forward.1} parent=1 // pred_fallthru
      _
    %59 = sfence
    %60 = vsyncpa [#allocation3], 1
    %61 = vsyncpa [#allocation4], 1
    %62 = vsyncpa [#allocation6], 1

</llo_original>
